<compile_context>
chip_gen: v5e
topology: v5e:2x2
jax: 0.10.0
libtpu: 0.0.40
codegen_flags: <defaults>
</compile_context>

<pallas_src>
import functools
import math

import jax
import jax.numpy as jnp
from jax.experimental import pallas as pl
from jax.experimental.pallas import tpu as pltpu

BN_EPS = 1e-5
LANE = 128


def _round_up(n, m):
    return (n + m - 1) // m * m


def siamese_mlps_kernel(
    b_valid,                                        # static python int (closure)
    x_ref,
    pw1_ref, pg_ref, pb_ref, pw2_ref, pbias_ref,    # projector params (padded)
    qw1_ref, qg_ref, qb_ref, qw2_ref, qbias_ref,    # predictor params (padded)
    zh_ref,                                         # (Bpad, 2*Dpad) f32: [z | h]
):
    """Fused: z = MLP_proj(x); h = MLP_pred(z).

    Each MLP = Linear(no bias) -> BatchNorm1d(train, eps=1e-5, affine)
             -> ReLU -> Linear(bias), matching the PyTorch module.
    Matmuls run bf16 x bf16 -> f32 on the MXU; BN/ReLU/bias math is f32.
    Batch-stat reductions are masked to the first `b_valid` rows so the
    sublane padding never affects the statistics.
    """
    bpad = x_ref.shape[0]
    row_mask = (jax.lax.broadcasted_iota(jnp.int32, (bpad, 1), 0)
                < b_valid).astype(jnp.float32)                      # (Bpad, 1)
    inv_b = 1.0 / float(b_valid)

    def mlp(x_bf16, w1_ref, g_ref, b_ref, w2_ref, bias_ref):
        # Linear 1 (no bias): (Bpad, K) @ (K, Hpad) -> f32      [MXU]
        a = jnp.dot(x_bf16, w1_ref[...], preferred_element_type=jnp.float32)
        # BatchNorm1d (training): masked batch stats, shifted two-pass variance.
        mean = jnp.sum(a * row_mask, axis=0, keepdims=True) * inv_b     # (1, Hpad)
        d = (a - mean) * row_mask
        var = jnp.maximum(jnp.sum(d * d, axis=0, keepdims=True) * inv_b, 0.0)
        # Folded affine: a_bn = a * scale + shift  (2 VALU ops / element).
        scale = g_ref[...] * jax.lax.rsqrt(var + BN_EPS)                # (1, Hpad)
        shift = b_ref[...] - mean * scale
        a_act = jnp.maximum(a * scale + shift, 0.0)                     # ReLU (VPU)
        # Linear 2 (bias): (Bpad, Hpad) @ (Hpad, Dpad) + b -> f32 [MXU]
        return jnp.dot(a_act.astype(jnp.bfloat16), w2_ref[...],
                       preferred_element_type=jnp.float32) + bias_ref[...]

    x_bf16 = x_ref[...].astype(jnp.bfloat16)
    z = mlp(x_bf16, pw1_ref, pg_ref, pb_ref, pw2_ref, pbias_ref)        # (Bpad, Dpad)
    h = mlp(z.astype(jnp.bfloat16), qw1_ref, qg_ref, qb_ref, qw2_ref, qbias_ref)
    # Single lane-dense writeback: [z | h], both halves 128-lane aligned.
    zh_ref[...] = jnp.concatenate([z, h], axis=1).astype(zh_ref.dtype)


def init_mlp_params(key, input_dim, hidden_size, output_dim,
                    weight_dtype=jnp.bfloat16, param_dtype=jnp.float32):
    """PyTorch-style uniform init, stored LANE-padded and pre-transposed.

    Weights are (in_pad, out_pad) bf16 (zero-padded), BN affine + bias are
    (1, pad) f32.  gamma/beta are zero in padded columns so padded hidden
    units stay exactly zero through BN/ReLU.
    """
    ipad = _round_up(input_dim, LANE)
    hpad = _round_up(hidden_size, LANE)
    dpad = _round_up(output_dim, LANE)
    k1, k2, k3 = jax.random.split(key, 3)
    bound1 = 1.0 / math.sqrt(input_dim)
    bound2 = 1.0 / math.sqrt(hidden_size)

    w1 = jax.random.uniform(k1, (input_dim, hidden_size), param_dtype,
                            minval=-bound1, maxval=bound1)
    w2 = jax.random.uniform(k2, (hidden_size, output_dim), param_dtype,
                            minval=-bound2, maxval=bound2)
    b2 = jax.random.uniform(k3, (output_dim,), param_dtype,
                            minval=-bound2, maxval=bound2)

    w1p = jnp.zeros((ipad, hpad), weight_dtype
                    ).at[:input_dim, :hidden_size].set(w1.astype(weight_dtype))
    gammap = jnp.zeros((1, hpad), param_dtype).at[:, :hidden_size].set(1.0)
    betap = jnp.zeros((1, hpad), param_dtype)
    w2p = jnp.zeros((hpad, dpad), weight_dtype
                    ).at[:hidden_size, :output_dim].set(w2.astype(weight_dtype))
    b2p = jnp.zeros((1, dpad), param_dtype).at[:, :output_dim].set(b2)
    return (w1p, gammap, betap, w2p, b2p)


def siamese_arm_forward(x, projector_params, predictor_params, output_dim):
    """Returns (y, z, h) exactly like SiameseArm.forward.

    encoder: identity (see TODO), so y == x (original shape).
    projector: MLP(input_dim -> hidden -> output_dim) on Flatten(y).
    predictor: MLP(output_dim -> hidden -> output_dim) on z.
    """
    # TODO(synk): `EmbedCNN` (the default encoder when encoder=None) is not
    # defined in the provided source; an identity encoder is used instead.
    y = x
    y_flat = y.reshape(y.shape[0], -1)               # Flatten() inside the MLP
    b, din = y_flat.shape

    pw1 = projector_params[0]
    din_pad, hpad = pw1.shape
    dpad = projector_params[3].shape[1]
    bpad = _round_up(max(b, 8), 8)

    # Zero-pad batch to a sublane multiple and features to the padded Din.
    x_pad = jnp.pad(y_flat, ((0, bpad - b), (0, din_pad - din)))

    vmem = pl.BlockSpec(memory_space=pltpu.MemorySpace.VMEM)

    flops = 2 * bpad * (din_pad * hpad + hpad * dpad + dpad * hpad + hpad * dpad)
    bytes_accessed = (
        int(x_pad.size) * x_pad.dtype.itemsize
        + sum(int(p.size) * p.dtype.itemsize for p in projector_params)
        + sum(int(p.size) * p.dtype.itemsize for p in predictor_params)
        + bpad * 2 * dpad * 4                        # fused z|h output (f32)
    )
    cost = pl.CostEstimate(flops=flops, transcendentals=2 * hpad,
                           bytes_accessed=bytes_accessed)

    zh = pl.pallas_call(
        functools.partial(siamese_mlps_kernel, b),
        out_shape=jax.ShapeDtypeStruct((bpad, 2 * dpad), jnp.float32),
        in_specs=[vmem] * 11,
        out_specs=vmem,
        cost_estimate=cost,
    )(x_pad, *projector_params, *predictor_params)

    z = zh[:b, :output_dim]
    h = zh[:b, dpad:dpad + output_dim]
    return y, z, h


if __name__ == "__main__":
    # Small shapes consistent with the module: x is (B, C, H, W); flattened
    # input_dim = C*H*W = 4*16*16 = 1024, hidden_size = 32, output_dim = 16.
    B, C, H, W = 2, 4, 16, 16
    input_dim = C * H * W
    hidden_size = 32
    output_dim = 16

    root = jax.random.PRNGKey(0)
    kx, kproj, kpred = jax.random.split(root, 3)

    x = jax.random.normal(kx, (B, C, H, W), dtype=jnp.float32)
    projector_params = init_mlp_params(kproj, input_dim, hidden_size, output_dim)
    predictor_params = init_mlp_params(kpred, output_dim, hidden_size, output_dim)

    y, z, h = siamese_arm_forward(x, projector_params, predictor_params, output_dim)
    jax.block_until_ready((y, z, h))

    assert y.shape == (B, C, H, W)
    assert z.shape == (B, output_dim) and z.dtype == jnp.float32
    assert h.shape == (B, output_dim) and h.dtype == jnp.float32
    assert bool(jnp.all(jnp.isfinite(z))) and bool(jnp.all(jnp.isfinite(h)))
    print("KERNEL_OK")
</pallas_src>

<mosaic_0001>
module attributes {stable_mosaic.version = 11 : i64} {
  func.func @siamese_mlps_kernel(%arg0: memref<8x1024xf32, #tpu.memory_space<vmem>>, %arg1: memref<1024x128xbf16, #tpu.memory_space<vmem>>, %arg2: memref<1x128xf32, #tpu.memory_space<vmem>>, %arg3: memref<1x128xf32, #tpu.memory_space<vmem>>, %arg4: memref<128x128xbf16, #tpu.memory_space<vmem>>, %arg5: memref<1x128xf32, #tpu.memory_space<vmem>>, %arg6: memref<128x128xbf16, #tpu.memory_space<vmem>>, %arg7: memref<1x128xf32, #tpu.memory_space<vmem>>, %arg8: memref<1x128xf32, #tpu.memory_space<vmem>>, %arg9: memref<128x128xbf16, #tpu.memory_space<vmem>>, %arg10: memref<1x128xf32, #tpu.memory_space<vmem>>, %arg11: memref<8x256xf32, #tpu.memory_space<vmem>>) attributes {dimension_semantics = [], scalar_prefetch = 0 : i64, scratch_operands = 0 : i64, tpu.core_type = #tpu.core_type<tc>} {
    %0 = tpu.iota {dimensions = array<i32: 0>} : vector<8x1xi32>
    %c2_i32 = arith.constant 2 : i32
    %1 = vector.broadcast %c2_i32 : i32 to vector<8x1xi32>
    %2 = arith.cmpi slt, %0, %1 : vector<8x1xi32>
    %3 = arith.extui %2 : vector<8x1xi1> to vector<8x1xi32>
    %4 = arith.sitofp %3 : vector<8x1xi32> to vector<8x1xf32>
    %c0 = arith.constant 0 : index
    %c0_0 = arith.constant 0 : index
    %5 = vector.load %arg0[%c0, %c0_0] : memref<8x1024xf32, #tpu.memory_space<vmem>>, vector<8x1024xf32>
    %6 = arith.truncf %5 : vector<8x1024xf32> to vector<8x1024xbf16>
    %c0_1 = arith.constant 0 : index
    %c0_2 = arith.constant 0 : index
    %7 = vector.load %arg1[%c0_1, %c0_2] : memref<1024x128xbf16, #tpu.memory_space<vmem>>, vector<1024x128xbf16>
    %cst = arith.constant dense<0.000000e+00> : vector<8x128xf32>
    %8 = tpu.matmul %6, %7, %cst {dimension_numbers = #tpu.dot_dimension_numbers<[1], [0], [0], [1], [0, 0, 1, 1], [], []>} : vector<8x1024xbf16>, vector<1024x128xbf16>, vector<8x128xf32> -> vector<8x128xf32>
    %9 = vector.broadcast %4 : vector<8x1xf32> to vector<8x128xf32>
    %10 = arith.mulf %8, %9 : vector<8x128xf32>
    %cst_3 = arith.constant dense<0.000000e+00> : vector<128xf32>
    %11 = vector.multi_reduction <add>, %10, %cst_3 [0] : vector<8x128xf32> to vector<128xf32>
    %12 = vector.shape_cast %11 : vector<128xf32> to vector<1x128xf32>
    %cst_4 = arith.constant 5.000000e-01 : f32
    %13 = vector.broadcast %cst_4 : f32 to vector<1x128xf32>
    %14 = arith.mulf %12, %13 : vector<1x128xf32>
    %15 = vector.broadcast %14 : vector<1x128xf32> to vector<8x128xf32>
    %16 = arith.subf %8, %15 : vector<8x128xf32>
    %17 = vector.broadcast %4 : vector<8x1xf32> to vector<8x128xf32>
    %18 = arith.mulf %16, %17 : vector<8x128xf32>
    %19 = arith.mulf %18, %18 : vector<8x128xf32>
    %cst_5 = arith.constant dense<0.000000e+00> : vector<128xf32>
    %20 = vector.multi_reduction <add>, %19, %cst_5 [0] : vector<8x128xf32> to vector<128xf32>
    %21 = vector.shape_cast %20 : vector<128xf32> to vector<1x128xf32>
    %cst_6 = arith.constant 5.000000e-01 : f32
    %22 = vector.broadcast %cst_6 : f32 to vector<1x128xf32>
    %23 = arith.mulf %21, %22 : vector<1x128xf32>
    %cst_7 = arith.constant 0.000000e+00 : f32
    %24 = vector.broadcast %cst_7 : f32 to vector<1x128xf32>
    %25 = arith.maximumf %23, %24 : vector<1x128xf32>
    %c0_8 = arith.constant 0 : index
    %c0_9 = arith.constant 0 : index
    %26 = vector.load %arg2[%c0_8, %c0_9] : memref<1x128xf32, #tpu.memory_space<vmem>>, vector<1x128xf32>
    %cst_10 = arith.constant 9.99999974E-6 : f32
    %27 = vector.broadcast %cst_10 : f32 to vector<1x128xf32>
    %28 = arith.addf %25, %27 : vector<1x128xf32>
    %29 = math.rsqrt %28 : vector<1x128xf32>
    %30 = arith.mulf %26, %29 : vector<1x128xf32>
    %c0_11 = arith.constant 0 : index
    %c0_12 = arith.constant 0 : index
    %31 = vector.load %arg3[%c0_11, %c0_12] : memref<1x128xf32, #tpu.memory_space<vmem>>, vector<1x128xf32>
    %32 = arith.mulf %14, %30 : vector<1x128xf32>
    %33 = arith.subf %31, %32 : vector<1x128xf32>
    %34 = vector.broadcast %30 : vector<1x128xf32> to vector<8x128xf32>
    %35 = arith.mulf %8, %34 : vector<8x128xf32>
    %36 = vector.broadcast %33 : vector<1x128xf32> to vector<8x128xf32>
    %37 = arith.addf %35, %36 : vector<8x128xf32>
    %cst_13 = arith.constant 0.000000e+00 : f32
    %38 = vector.broadcast %cst_13 : f32 to vector<8x128xf32>
    %39 = arith.maximumf %37, %38 : vector<8x128xf32>
    %40 = arith.truncf %39 : vector<8x128xf32> to vector<8x128xbf16>
    %c0_14 = arith.constant 0 : index
    %c0_15 = arith.constant 0 : index
    %41 = vector.load %arg4[%c0_14, %c0_15] : memref<128x128xbf16, #tpu.memory_space<vmem>>, vector<128x128xbf16>
    %cst_16 = arith.constant dense<0.000000e+00> : vector<8x128xf32>
    %42 = tpu.matmul %40, %41, %cst_16 {dimension_numbers = #tpu.dot_dimension_numbers<[1], [0], [0], [1], [0, 0, 1, 1], [], []>} : vector<8x128xbf16>, vector<128x128xbf16>, vector<8x128xf32> -> vector<8x128xf32>
    %c0_17 = arith.constant 0 : index
    %c0_18 = arith.constant 0 : index
    %43 = vector.load %arg5[%c0_17, %c0_18] : memref<1x128xf32, #tpu.memory_space<vmem>>, vector<1x128xf32>
    %44 = vector.broadcast %43 : vector<1x128xf32> to vector<8x128xf32>
    %45 = arith.addf %42, %44 : vector<8x128xf32>
    %46 = arith.truncf %45 : vector<8x128xf32> to vector<8x128xbf16>
    %c0_19 = arith.constant 0 : index
    %c0_20 = arith.constant 0 : index
    %47 = vector.load %arg6[%c0_19, %c0_20] : memref<128x128xbf16, #tpu.memory_space<vmem>>, vector<128x128xbf16>
    %cst_21 = arith.constant dense<0.000000e+00> : vector<8x128xf32>
    %48 = tpu.matmul %46, %47, %cst_21 {dimension_numbers = #tpu.dot_dimension_numbers<[1], [0], [0], [1], [0, 0, 1, 1], [], []>} : vector<8x128xbf16>, vector<128x128xbf16>, vector<8x128xf32> -> vector<8x128xf32>
    %49 = vector.broadcast %4 : vector<8x1xf32> to vector<8x128xf32>
    %50 = arith.mulf %48, %49 : vector<8x128xf32>
    %cst_22 = arith.constant dense<0.000000e+00> : vector<128xf32>
    %51 = vector.multi_reduction <add>, %50, %cst_22 [0] : vector<8x128xf32> to vector<128xf32>
    %52 = vector.shape_cast %51 : vector<128xf32> to vector<1x128xf32>
    %cst_23 = arith.constant 5.000000e-01 : f32
    %53 = vector.broadcast %cst_23 : f32 to vector<1x128xf32>
    %54 = arith.mulf %52, %53 : vector<1x128xf32>
    %55 = vector.broadcast %54 : vector<1x128xf32> to vector<8x128xf32>
    %56 = arith.subf %48, %55 : vector<8x128xf32>
    %57 = vector.broadcast %4 : vector<8x1xf32> to vector<8x128xf32>
    %58 = arith.mulf %56, %57 : vector<8x128xf32>
    %59 = arith.mulf %58, %58 : vector<8x128xf32>
    %cst_24 = arith.constant dense<0.000000e+00> : vector<128xf32>
    %60 = vector.multi_reduction <add>, %59, %cst_24 [0] : vector<8x128xf32> to vector<128xf32>
    %61 = vector.shape_cast %60 : vector<128xf32> to vector<1x128xf32>
    %cst_25 = arith.constant 5.000000e-01 : f32
    %62 = vector.broadcast %cst_25 : f32 to vector<1x128xf32>
    %63 = arith.mulf %61, %62 : vector<1x128xf32>
    %cst_26 = arith.constant 0.000000e+00 : f32
    %64 = vector.broadcast %cst_26 : f32 to vector<1x128xf32>
    %65 = arith.maximumf %63, %64 : vector<1x128xf32>
    %c0_27 = arith.constant 0 : index
    %c0_28 = arith.constant 0 : index
    %66 = vector.load %arg7[%c0_27, %c0_28] : memref<1x128xf32, #tpu.memory_space<vmem>>, vector<1x128xf32>
    %cst_29 = arith.constant 9.99999974E-6 : f32
    %67 = vector.broadcast %cst_29 : f32 to vector<1x128xf32>
    %68 = arith.addf %65, %67 : vector<1x128xf32>
    %69 = math.rsqrt %68 : vector<1x128xf32>
    %70 = arith.mulf %66, %69 : vector<1x128xf32>
    %c0_30 = arith.constant 0 : index
    %c0_31 = arith.constant 0 : index
    %71 = vector.load %arg8[%c0_30, %c0_31] : memref<1x128xf32, #tpu.memory_space<vmem>>, vector<1x128xf32>
    %72 = arith.mulf %54, %70 : vector<1x128xf32>
    %73 = arith.subf %71, %72 : vector<1x128xf32>
    %74 = vector.broadcast %70 : vector<1x128xf32> to vector<8x128xf32>
    %75 = arith.mulf %48, %74 : vector<8x128xf32>
    %76 = vector.broadcast %73 : vector<1x128xf32> to vector<8x128xf32>
    %77 = arith.addf %75, %76 : vector<8x128xf32>
    %cst_32 = arith.constant 0.000000e+00 : f32
    %78 = vector.broadcast %cst_32 : f32 to vector<8x128xf32>
    %79 = arith.maximumf %77, %78 : vector<8x128xf32>
    %80 = arith.truncf %79 : vector<8x128xf32> to vector<8x128xbf16>
    %c0_33 = arith.constant 0 : index
    %c0_34 = arith.constant 0 : index
    %81 = vector.load %arg9[%c0_33, %c0_34] : memref<128x128xbf16, #tpu.memory_space<vmem>>, vector<128x128xbf16>
    %cst_35 = arith.constant dense<0.000000e+00> : vector<8x128xf32>
    %82 = tpu.matmul %80, %81, %cst_35 {dimension_numbers = #tpu.dot_dimension_numbers<[1], [0], [0], [1], [0, 0, 1, 1], [], []>} : vector<8x128xbf16>, vector<128x128xbf16>, vector<8x128xf32> -> vector<8x128xf32>
    %c0_36 = arith.constant 0 : index
    %c0_37 = arith.constant 0 : index
    %83 = vector.load %arg10[%c0_36, %c0_37] : memref<1x128xf32, #tpu.memory_space<vmem>>, vector<1x128xf32>
    %84 = vector.broadcast %83 : vector<1x128xf32> to vector<8x128xf32>
    %85 = arith.addf %82, %84 : vector<8x128xf32>
    %86 = tpu.concatenate %45, %85 in 1 : vector<8x128xf32>, vector<8x128xf32> -> vector<8x256xf32>
    %c0_38 = arith.constant 0 : index
    %c0_39 = arith.constant 0 : index
    %87 = vector.load %arg11[%c0_38, %c0_39] : memref<8x256xf32, #tpu.memory_space<vmem>>, vector<8x256xf32>
    tpu.vector_store %arg11[%c0_38, %c0_39], %86 {strides = array<i32>} : memref<8x256xf32, #tpu.memory_space<vmem>>, vector<8x256xf32>,
    return
  }
}

</mosaic_0001>

<llo_original>
// kernel: tpu_custom_call.1
$region0: #{tpu_custom_call.1}
  #allocation0 [shape = 'u32[]', space=smem, size = 0x4, offset = 0x4, fixed_abs, tag = 'smem constant byte address 0x4 - core index']
  #allocation1 [shape = 'u32[72,128]{1,0:T(1,128)}', space=vmem, size = 0x9000, scoped, tag = 'internal scratch']
  %s0 = inlined_call_operand.hbm [shape: f32[8,1024], index: 0, kind: input, shape index: {}]
  %s1 = inlined_call_operand.hbm [shape: bf16[1024,128], index: 1, kind: input, shape index: {}]
  %s2 = inlined_call_operand.vmem [shape: f32[1,128], index: 2, kind: input, shape index: {}]
  %s3 = inlined_call_operand.vmem [shape: f32[1,128], index: 3, kind: input, shape index: {}]
  %s4 = inlined_call_operand.hbm [shape: bf16[128,128], index: 4, kind: input, shape index: {}]
  %s5 = inlined_call_operand.vmem [shape: f32[1,128], index: 5, kind: input, shape index: {}]
  %s6 = inlined_call_operand.hbm [shape: bf16[128,128], index: 6, kind: input, shape index: {}]
  %s7 = inlined_call_operand.vmem [shape: f32[1,128], index: 7, kind: input, shape index: {}]
  %s8 = inlined_call_operand.vmem [shape: f32[1,128], index: 8, kind: input, shape index: {}]
  %s9 = inlined_call_operand.hbm [shape: bf16[128,128], index: 9, kind: input, shape index: {}]
  %s10 = inlined_call_operand.vmem [shape: f32[1,128], index: 10, kind: input, shape index: {}]
  %s11 = inlined_call_operand.hbm [shape: f32[8,256], index: 11, kind: output, shape index: {}]
  %s12 = sld [smem:[#allocation0]]
  $region74: #{tpu_custom_call.1} parent=0
    _
  %s14 = ssub.s32 1, %s12
  %s15 = scalar_select 0, %s14, %s12
  $region1: #{tpu_custom_call.1} parent=0
    #allocation2 [shape = 'u8[32768]{0}', space=vmem, size = 0x8000, scoped, tag = 'input window, operand 0, single buffered']
    #allocation3 [shape = 's32[1]{0}', space=sflag, size = 0x4, scoped, tag = 'scoped memory for tpu_custom_call.1']
    #allocation4 [shape = 's32[1]{0}', space=sflag, size = 0x4, scoped, tag = 'scoped memory for tpu_custom_call.1']
    #allocation5 [shape = 'u8[262144]{0}', space=vmem, size = 0x40000, scoped, tag = 'input window, operand 1, single buffered']
    #allocation6 [shape = 's32[1]{0}', space=sflag, size = 0x4, scoped, tag = 'scoped memory for tpu_custom_call.1']
    #allocation7 [shape = 'u8[32768]{0}', space=vmem, size = 0x8000, scoped, tag = 'input window, operand 4, single buffered']
    #allocation8 [shape = 'u8[32768]{0}', space=vmem, size = 0x8000, scoped, tag = 'input window, operand 6, single buffered']
    #allocation9 [shape = 's32[1]{0}', space=sflag, size = 0x4, scoped, tag = 'scoped memory for tpu_custom_call.1']
    #allocation10 [shape = 'u8[32768]{0}', space=vmem, size = 0x8000, scoped, tag = 'input window, operand 9, single buffered']
    #allocation11 [shape = 'u8[8192]{0}', space=vmem, size = 0x2000, scoped, tag = 'output window, operand 0, single buffered']
    %16 = vsyncpa [#allocation3], 0
    %17 = vsyncpa [#allocation6], 0
    %18 = vsyncpa [#allocation9], 0
    %19 = vsyncpa [#allocation4], 0
    // Predicated region
    $region2: #{tpu_custom_call.1} parent=1 // pred_check
      _
    $region3: #{tpu_custom_call.1} parent=1 // pred_check_branch
      %21 = sbr.rel (0) target = $region5
    $region4: #{tpu_custom_call.1} parent=1 // pred_region
      %23 = vsyncadd [#allocation3], 0
      %s25 = sshll.u32 %s0, 4
      %s26 = int_to_ptr.hbm [resolvable:$true] %s25
      %s27 = sshll.u32 [#allocation2], 4
      %s28 = int_to_ptr.vmem [resolvable:$true] %s27
      %30 = dma.hbm_to_vmem [thread:$0]  %s26, 1024, %s28, [#allocation3]
    $region5: #{tpu_custom_call.1} parent=1 // pred_fallthru
      _
    // Predicated region
    $region6: #{tpu_custom_call.1} parent=1 // pred_check
      _
    $region7: #{tpu_custom_call.1} parent=1 // pred_check_branch
      %32 = sbr.rel (0) target = $region9
    $region8: #{tpu_custom_call.1} parent=1 // pred_region
      %34 = vsyncadd [#allocation6], 0
      %s35 = sshll.u32 %s1, 4
      %s36 = int_to_ptr.hbm [resolvable:$true] %s35
      %s37 = sshll.u32 [#allocation5], 4
      %s38 = int_to_ptr.vmem [resolvable:$true] %s37
      %43 = dma.hbm_to_vmem [thread:$0]  %s36, 8192, %s38, [#allocation6], 64, 64, 4
    $region9: #{tpu_custom_call.1} parent=1 // pred_fallthru
      _
    // Predicated region
    $region10: #{tpu_custom_call.1} parent=1 // pred_check
      _
    $region11: #{tpu_custom_call.1} parent=1 // pred_check_branch
      %45 = sbr.rel (0) target = $region13
    $region12: #{tpu_custom_call.1} parent=1 // pred_region
      _
    $region13: #{tpu_custom_call.1} parent=1 // pred_fallthru
      _
    // Predicated region
    $region14: #{tpu_custom_call.1} parent=1 // pred_check
      _
    $region15: #{tpu_custom_call.1} parent=1 // pred_check_branch
      %47 = sbr.rel (0) target = $region17
    $region16: #{tpu_custom_call.1} parent=1 // pred_region
      _
    $region17: #{tpu_custom_call.1} parent=1 // pred_fallthru
      _
    // Predicated region
    $region18: #{tpu_custom_call.1} parent=1 // pred_check
      _
    $region19: #{tpu_custom_call.1} parent=1 // pred_check_branch
      %49 = sbr.rel (0) target = $region21
    $region20: #{tpu_custom_call.1} parent=1 // pred_region
      %51 = vsyncadd [#allocation6], 0
      %s52 = sshll.u32 %s4, 4
      %s53 = int_to_ptr.hbm [resolvable:$true] %s52
      %s54 = sshll.u32 [#allocation7], 4
      %s55 = int_to_ptr.vmem [resolvable:$true] %s54
      %60 = dma.hbm_to_vmem [thread:$0]  %s53, 1024, %s55, [#allocation6], 64, 64, 4
    $region21: #{tpu_custom_call.1} parent=1 // pred_fallthru
      _
    // Predicated region
    $region22: #{tpu_custom_call.1} parent=1 // pred_check
      _
    $region23: #{tpu_custom_call.1} parent=1 // pred_check_branch
      %62 = sbr.rel (0) target = $region25
    $region24: #{tpu_custom_call.1} parent=1 // pred_region
      _
    $region25: #{tpu_custom_call.1} parent=1 // pred_fallthru
      _
    // Predicated region
    $region26: #{tpu_custom_call.1} parent=1 // pred_check
      _
    $region27: #{tpu_custom_call.1} parent=1 // pred_check_branch
      %64 = sbr.rel (0) target = $region29
    $region28: #{tpu_custom_call.1} parent=1 // pred_region
      %66 = vsyncadd [#allocation9], 0
      %s67 = sshll.u32 %s6, 4
      %s68 = int_to_ptr.hbm [resolvable:$true] %s67
      %s69 = sshll.u32 [#allocation8], 4
      %s70 = int_to_ptr.vmem [resolvable:$true] %s69
      %75 = dma.hbm_to_vmem [thread:$0]  %s68, 1024, %s70, [#allocation9], 64, 64, 4
    $region29: #{tpu_custom_call.1} parent=1 // pred_fallthru
      _
    // Predicated region
    $region30: #{tpu_custom_call.1} parent=1 // pred_check
      _
    $region31: #{tpu_custom_call.1} parent=1 // pred_check_branch
      %77 = sbr.rel (0) target = $region33
    $region32: #{tpu_custom_call.1} parent=1 // pred_region
      _
    $region33: #{tpu_custom_call.1} parent=1 // pred_fallthru
      _
    // Predicated region
    $region34: #{tpu_custom_call.1} parent=1 // pred_check
      _
    $region35: #{tpu_custom_call.1} parent=1 // pred_check_branch
      %79 = sbr.rel (0) target = $region37
    $region36: #{tpu_custom_call.1} parent=1 // pred_region
      _
    $region37: #{tpu_custom_call.1} parent=1 // pred_fallthru
      _
    // Predicated region
    $region38: #{tpu_custom_call.1} parent=1 // pred_check
      _
    $region39: #{tpu_custom_call.1} parent=1 // pred_check_branch
      %81 = sbr.rel (0) target = $region41
    $region40: #{tpu_custom_call.1} parent=1 // pred_region
      %83 = vsyncadd [#allocation9], 0
      %s84 = sshll.u32 %s9, 4
      %s85 = int_to_ptr.hbm [resolvable:$true] %s84
      %s86 = sshll.u32 [#allocation10], 4
      %s87 = int_to_ptr.vmem [resolvable:$true] %s86
      %92 = dma.hbm_to_vmem [thread:$0]  %s85, 1024, %s87, [#allocation9], 64, 64, 4
    $region41: #{tpu_custom_call.1} parent=1 // pred_fallthru
      _
    // Predicated region
    $region42: #{tpu_custom_call.1} parent=1 // pred_check
      _
    $region43: #{tpu_custom_call.1} parent=1 // pred_check_branch
      %94 = sbr.rel (0) target = $region45
    $region44: #{tpu_custom_call.1} parent=1 // pred_region
      _
    $region45: #{tpu_custom_call.1} parent=1 // pred_fallthru
      _
    // Predicated region
    $region46: #{tpu_custom_call.1} parent=1 // pred_check
      _
    $region47: #{tpu_custom_call.1} parent=1 // pred_check_branch
      %96 = sbr.rel (0) target = $region49
    $region48: #{tpu_custom_call.1} parent=1 // pred_region
      %98 = dma.done [#allocation3], 1024
    $region49: #{tpu_custom_call.1} parent=1 // pred_fallthru
      _
    // Predicated region
    $region50: #{tpu_custom_call.1} parent=1 // pred_check
      _
    $region51: #{tpu_custom_call.1} parent=1 // pred_check_branch
      %100 = sbr.rel (0) target = $region53
    $region52: #{tpu_custom_call.1} parent=1 // pred_region
      %102 = dma.done [#allocation6], 8192
    $region53: #{tpu_custom_call.1} parent=1 // pred_fallthru
      _
    // Predicated region
    $region54: #{tpu_custom_call.1} parent=1 // pred_check
      _
    $region55: #{tpu_custom_call.1} parent=1 // pred_check_branch
      %104 = sbr.rel (0) target = $region57
    $region56: #{tpu_custom_call.1} parent=1 // pred_region
      %106 = dma.done [#allocation6], 1024
    $region57: #{tpu_custom_call.1} parent=1 // pred_fallthru
      _
    // Predicated region
    $region58: #{tpu_custom_call.1} parent=1 // pred_check
      _
    $region59: #{tpu_custom_call.1} parent=1 // pred_check_branch
      %108 = sbr.rel (0) target = $region61
    $region60: #{tpu_custom_call.1} parent=1 // pred_region
      %110 = dma.done [#allocation9], 1024
    $region61: #{tpu_custom_call.1} parent=1 // pred_fallthru
      _
    // Predicated region
    $region62: #{tpu_custom_call.1} parent=1 // pred_check
      _
    $region63: #{tpu_custom_call.1} parent=1 // pred_check_branch
      %112 = sbr.rel (0) target = $region65
    $region64: #{tpu_custom_call.1} parent=1 // pred_region
      %114 = dma.done [#allocation9], 1024
    $region65: #{tpu_custom_call.1} parent=1 // pred_fallthru
      _
    %v115 = vlaneseq
    %v116 = vshrl.u32 %v115, 7
    %vm117 = vcmp.lt.s32.totalorder %v116, 2
    %v118 = vsel %vm117, 1, 0
    %v119 = vcvt.s32.f32 %v118
    %v120 = vld [vmem:[#allocation2] sm:$0xff]
    %v121 = vld [vmem:[#allocation2 + $0x8] sm:$0xff]
    %v122 = vld [vmem:[#allocation2 + $0x10] sm:$0xff]
    %v123 = vld [vmem:[#allocation2 + $0x18] sm:$0xff]
    %v124 = vld [vmem:[#allocation2 + $0x20] sm:$0xff]
    %v125 = vld [vmem:[#allocation2 + $0x28] sm:$0xff]
    %v126 = vld [vmem:[#allocation2 + $0x30] sm:$0xff]
    %v127 = vld [vmem:[#allocation2 + $0x38] sm:$0xff]
    %v128 = vpack.c.bf16 %v120, %v120
    %v129 = vpack.c.bf16 %v121, %v121
    %v130 = vpack.c.bf16 %v122, %v122
    %v131 = vpack.c.bf16 %v123, %v123
    %v132 = vpack.c.bf16 %v124, %v124
    %v133 = vpack.c.bf16 %v125, %v125
    %v134 = vpack.c.bf16 %v126, %v126
    %v135 = vpack.c.bf16 %v127, %v127
    %v136 = vld [vmem:[#allocation5] sm:$0xf]
    %v137 = vld [vmem:[#allocation5 + $0x4] sm:$0xf]
    %v138 = vld [vmem:[#allocation5 + $0x8] sm:$0xf]
    %v139 = vld [vmem:[#allocation5 + $0xc] sm:$0xf]
    %v140 = vld [vmem:[#allocation5 + $0x10] sm:$0xf]
    %v141 = vld [vmem:[#allocation5 + $0x14] sm:$0xf]
    %v142 = vld [vmem:[#allocation5 + $0x18] sm:$0xf]
    %v143 = vld [vmem:[#allocation5 + $0x1c] sm:$0xf]
    %v144 = vld [vmem:[#allocation5 + $0x20] sm:$0xf]
    %v145 = vld [vmem:[#allocation5 + $0x24] sm:$0xf]
    %v146 = vld [vmem:[#allocation5 + $0x28] sm:$0xf]
    %v147 = vld [vmem:[#allocation5 + $0x2c] sm:$0xf]
    %v148 = vld [vmem:[#allocation5 + $0x30] sm:$0xf]
    %v149 = vld [vmem:[#allocation5 + $0x34] sm:$0xf]
    %v150 = vld [vmem:[#allocation5 + $0x38] sm:$0xf]
    %v151 = vld [vmem:[#allocation5 + $0x3c] sm:$0xf]
    %v152 = vld [vmem:[#allocation5 + $0x40] sm:$0xf]
    %v153 = vld [vmem:[#allocation5 + $0x44] sm:$0xf]
    %v154 = vld [vmem:[#allocation5 + $0x48] sm:$0xf]
    %v155 = vld [vmem:[#allocation5 + $0x4c] sm:$0xf]
    %v156 = vld [vmem:[#allocation5 + $0x50] sm:$0xf]
    %v157 = vld [vmem:[#allocation5 + $0x54] sm:$0xf]
    %v158 = vld [vmem:[#allocation5 + $0x58] sm:$0xf]
    %v159 = vld [vmem:[#allocation5 + $0x5c] sm:$0xf]
    %v160 = vld [vmem:[#allocation5 + $0x60] sm:$0xf]
    %v161 = vld [vmem:[#allocation5 + $0x64] sm:$0xf]
    %v162 = vld [vmem:[#allocation5 + $0x68] sm:$0xf]
    %v163 = vld [vmem:[#allocation5 + $0x6c] sm:$0xf]
    %v164 = vld [vmem:[#allocation5 + $0x70] sm:$0xf]
    %v165 = vld [vmem:[#allocation5 + $0x74] sm:$0xf]
    %v166 = vld [vmem:[#allocation5 + $0x78] sm:$0xf]
    %v167 = vld [vmem:[#allocation5 + $0x7c] sm:$0xf]
    %v168 = vld [vmem:[#allocation5 + $0x80] sm:$0xf]
    %v169 = vld [vmem:[#allocation5 + $0x84] sm:$0xf]
    %v170 = vld [vmem:[#allocation5 + $0x88] sm:$0xf]
    %v171 = vld [vmem:[#allocation5 + $0x8c] sm:$0xf]
    %v172 = vld [vmem:[#allocation5 + $0x90] sm:$0xf]
    %v173 = vld [vmem:[#allocation5 + $0x94] sm:$0xf]
    %v174 = vld [vmem:[#allocation5 + $0x98] sm:$0xf]
    %v175 = vld [vmem:[#allocation5 + $0x9c] sm:$0xf]
    %v176 = vld [vmem:[#allocation5 + $0xa0] sm:$0xf]
    %v177 = vld [vmem:[#allocation5 + $0xa4] sm:$0xf]
    %v178 = vld [vmem:[#allocation5 + $0xa8] sm:$0xf]
    %v179 = vld [vmem:[#allocation5 + $0xac] sm:$0xf]
    %v180 = vld [vmem:[#allocation5 + $0xb0] sm:$0xf]
    %v181 = vld [vmem:[#allocation5 + $0xb4] sm:$0xf]
    %v182 = vld [vmem:[#allocation5 + $0xb8] sm:$0xf]
    %v183 = vld [vmem:[#allocation5 + $0xbc] sm:$0xf]
    %v184 = vld [vmem:[#allocation5 + $0xc0] sm:$0xf]
    %v185 = vld [vmem:[#allocation5 + $0xc4] sm:$0xf]
    %v186 = vld [vmem:[#allocation5 + $0xc8] sm:$0xf]
    %v187 = vld [vmem:[#allocation5 + $0xcc] sm:$0xf]
    %v188 = vld [vmem:[#allocation5 + $0xd0] sm:$0xf]
    %v189 = vld [vmem:[#allocation5 + $0xd4] sm:$0xf]
    %v190 = vld [vmem:[#allocation5 + $0xd8] sm:$0xf]
    %v191 = vld [vmem:[#allocation5 + $0xdc] sm:$0xf]
    %v192 = vld [vmem:[#allocation5 + $0xe0] sm:$0xf]
    %v193 = vld [vmem:[#allocation5 + $0xe4] sm:$0xf]
    %v194 = vld [vmem:[#allocation5 + $0xe8] sm:$0xf]
    %v195 = vld [vmem:[#allocation5 + $0xec] sm:$0xf]
    %v196 = vld [vmem:[#allocation5 + $0xf0] sm:$0xf]
    %v197 = vld [vmem:[#allocation5 + $0xf4] sm:$0xf]
    %v198 = vld [vmem:[#allocation5 + $0xf8] sm:$0xf]
    %v199 = vld [vmem:[#allocation5 + $0xfc] sm:$0xf]
    %v200 = vld [vmem:[#allocation5 + $0x100] sm:$0xf]
    %v201 = vld [vmem:[#allocation5 + $0x104] sm:$0xf]
    %v202 = vld [vmem:[#allocation5 + $0x108] sm:$0xf]
    %v203 = vld [vmem:[#allocation5 + $0x10c] sm:$0xf]
    %v204 = vld [vmem:[#allocation5 + $0x110] sm:$0xf]
    %v205 = vld [vmem:[#allocation5 + $0x114] sm:$0xf]
    %v206 = vld [vmem:[#allocation5 + $0x118] sm:$0xf]
    %v207 = vld [vmem:[#allocation5 + $0x11c] sm:$0xf]
    %v208 = vld [vmem:[#allocation5 + $0x120] sm:$0xf]
    %v209 = vld [vmem:[#allocation5 + $0x124] sm:$0xf]
    %v210 = vld [vmem:[#allocation5 + $0x128] sm:$0xf]
    %v211 = vld [vmem:[#allocation5 + $0x12c] sm:$0xf]
    %v212 = vld [vmem:[#allocation5 + $0x130] sm:$0xf]
    %v213 = vld [vmem:[#allocation5 + $0x134] sm:$0xf]
    %v214 = vld [vmem:[#allocation5 + $0x138] sm:$0xf]
    %v215 = vld [vmem:[#allocation5 + $0x13c] sm:$0xf]
    %v216 = vld [vmem:[#allocation5 + $0x140] sm:$0xf]
    %v217 = vld [vmem:[#allocation5 + $0x144] sm:$0xf]
    %v218 = vld [vmem:[#allocation5 + $0x148] sm:$0xf]
    %v219 = vld [vmem:[#allocation5 + $0x14c] sm:$0xf]
    %v220 = vld [vmem:[#allocation5 + $0x150] sm:$0xf]
    %v221 = vld [vmem:[#allocation5 + $0x154] sm:$0xf]
    %v222 = vld [vmem:[#allocation5 + $0x158] sm:$0xf]
    %v223 = vld [vmem:[#allocation5 + $0x15c] sm:$0xf]
    %v224 = vld [vmem:[#allocation5 + $0x160] sm:$0xf]
    %v225 = vld [vmem:[#allocation5 + $0x164] sm:$0xf]
    %v226 = vld [vmem:[#allocation5 + $0x168] sm:$0xf]
    %v227 = vld [vmem:[#allocation5 + $0x16c] sm:$0xf]
    %v228 = vld [vmem:[#allocation5 + $0x170] sm:$0xf]
    %v229 = vld [vmem:[#allocation5 + $0x174] sm:$0xf]
    %v230 = vld [vmem:[#allocation5 + $0x178] sm:$0xf]
    %v231 = vld [vmem:[#allocation5 + $0x17c] sm:$0xf]
    %v232 = vld [vmem:[#allocation5 + $0x180] sm:$0xf]
    %v233 = vld [vmem:[#allocation5 + $0x184] sm:$0xf]
    %v234 = vld [vmem:[#allocation5 + $0x188] sm:$0xf]
    %v235 = vld [vmem:[#allocation5 + $0x18c] sm:$0xf]
    %v236 = vld [vmem:[#allocation5 + $0x190] sm:$0xf]
    %v237 = vld [vmem:[#allocation5 + $0x194] sm:$0xf]
    %v238 = vld [vmem:[#allocation5 + $0x198] sm:$0xf]
    %v239 = vld [vmem:[#allocation5 + $0x19c] sm:$0xf]
    %v240 = vld [vmem:[#allocation5 + $0x1a0] sm:$0xf]
    %v241 = vld [vmem:[#allocation5 + $0x1a4] sm:$0xf]
    %v242 = vld [vmem:[#allocation5 + $0x1a8] sm:$0xf]
    %v243 = vld [vmem:[#allocation5 + $0x1ac] sm:$0xf]
    %v244 = vld [vmem:[#allocation5 + $0x1b0] sm:$0xf]
    %v245 = vld [vmem:[#allocation5 + $0x1b4] sm:$0xf]
    %v246 = vld [vmem:[#allocation5 + $0x1b8] sm:$0xf]
    %v247 = vld [vmem:[#allocation5 + $0x1bc] sm:$0xf]
    %v248 = vld [vmem:[#allocation5 + $0x1c0] sm:$0xf]
    %v249 = vld [vmem:[#allocation5 + $0x1c4] sm:$0xf]
    %v250 = vld [vmem:[#allocation5 + $0x1c8] sm:$0xf]
    %v251 = vld [vmem:[#allocation5 + $0x1cc] sm:$0xf]
    %v252 = vld [vmem:[#allocation5 + $0x1d0] sm:$0xf]
    %v253 = vld [vmem:[#allocation5 + $0x1d4] sm:$0xf]
    %v254 = vld [vmem:[#allocation5 + $0x1d8] sm:$0xf]
    %v255 = vld [vmem:[#allocation5 + $0x1dc] sm:$0xf]
    %v256 = vld [vmem:[#allocation5 + $0x1e0] sm:$0xf]
    %v257 = vld [vmem:[#allocation5 + $0x1e4] sm:$0xf]
    %v258 = vld [vmem:[#allocation5 + $0x1e8] sm:$0xf]
    %v259 = vld [vmem:[#allocation5 + $0x1ec] sm:$0xf]
    %v260 = vld [vmem:[#allocation5 + $0x1f0] sm:$0xf]
    %v261 = vld [vmem:[#allocation5 + $0x1f4] sm:$0xf]
    %v262 = vld [vmem:[#allocation5 + $0x1f8] sm:$0xf]
    %v263 = vld [vmem:[#allocation5 + $0x1fc] sm:$0xf]
    %v392 = vunpack.c.l.b16 %v136
    %v393 = vunpack.c.l.b16 %v137
    %v394 = vunpack.c.l.b16 %v138
    %v395 = vunpack.c.l.b16 %v139
    %v396 = vunpack.c.l.b16 %v140
    %v397 = vunpack.c.l.b16 %v141
    %v398 = vunpack.c.l.b16 %v142
    %v399 = vunpack.c.l.b16 %v143
    %v400 = vunpack.c.l.b16 %v144
    %v401 = vunpack.c.l.b16 %v145
    %v402 = vunpack.c.l.b16 %v146
    %v403 = vunpack.c.l.b16 %v147
    %v404 = vunpack.c.l.b16 %v148
    %v405 = vunpack.c.l.b16 %v149
    %v406 = vunpack.c.l.b16 %v150
    %v407 = vunpack.c.l.b16 %v151
    %v408 = vunpack.c.l.b16 %v152
    %v409 = vunpack.c.l.b16 %v153
    %v410 = vunpack.c.l.b16 %v154
    %v411 = vunpack.c.l.b16 %v155
    %v412 = vunpack.c.l.b16 %v156
    %v413 = vunpack.c.l.b16 %v157
    %v414 = vunpack.c.l.b16 %v158
    %v415 = vunpack.c.l.b16 %v159
    %v416 = vunpack.c.l.b16 %v160
    %v417 = vunpack.c.l.b16 %v161
    %v418 = vunpack.c.l.b16 %v162
    %v419 = vunpack.c.l.b16 %v163
    %v420 = vunpack.c.l.b16 %v164
    %v421 = vunpack.c.l.b16 %v165
    %v422 = vunpack.c.l.b16 %v166
    %v423 = vunpack.c.l.b16 %v167
    %v424 = vunpack.c.l.b16 %v168
    %v425 = vunpack.c.l.b16 %v169
    %v426 = vunpack.c.l.b16 %v170
    %v427 = vunpack.c.l.b16 %v171
    %v428 = vunpack.c.l.b16 %v172
    %v429 = vunpack.c.l.b16 %v173
    %v430 = vunpack.c.l.b16 %v174
    %v431 = vunpack.c.l.b16 %v175
    %v432 = vunpack.c.l.b16 %v176
    %v433 = vunpack.c.l.b16 %v177
    %v434 = vunpack.c.l.b16 %v178
    %v435 = vunpack.c.l.b16 %v179
    %v436 = vunpack.c.l.b16 %v180
    %v437 = vunpack.c.l.b16 %v181
    %v438 = vunpack.c.l.b16 %v182
    %v439 = vunpack.c.l.b16 %v183
    %v440 = vunpack.c.l.b16 %v184
    %v441 = vunpack.c.l.b16 %v185
    %v442 = vunpack.c.l.b16 %v186
    %v443 = vunpack.c.l.b16 %v187
    %v444 = vunpack.c.l.b16 %v188
    %v445 = vunpack.c.l.b16 %v189
    %v446 = vunpack.c.l.b16 %v190
    %v447 = vunpack.c.l.b16 %v191
    %v448 = vunpack.c.l.b16 %v192
    %v449 = vunpack.c.l.b16 %v193
    %v450 = vunpack.c.l.b16 %v194
    %v451 = vunpack.c.l.b16 %v195
    %v452 = vunpack.c.l.b16 %v196
    %v453 = vunpack.c.l.b16 %v197
    %v454 = vunpack.c.l.b16 %v198
    %v455 = vunpack.c.l.b16 %v199
    %v456 = vunpack.c.l.b16 %v200
    %v457 = vunpack.c.l.b16 %v201
    %v458 = vunpack.c.l.b16 %v202
    %v459 = vunpack.c.l.b16 %v203
    %v460 = vunpack.c.l.b16 %v204
    %v461 = vunpack.c.l.b16 %v205
    %v462 = vunpack.c.l.b16 %v206
    %v463 = vunpack.c.l.b16 %v207
    %v464 = vunpack.c.l.b16 %v208
    %v465 = vunpack.c.l.b16 %v209
    %v466 = vunpack.c.l.b16 %v210
    %v467 = vunpack.c.l.b16 %v211
    %v468 = vunpack.c.l.b16 %v212
    %v469 = vunpack.c.l.b16 %v213
    %v470 = vunpack.c.l.b16 %v214
    %v471 = vunpack.c.l.b16 %v215
    %v472 = vunpack.c.l.b16 %v216
    %v473 = vunpack.c.l.b16 %v217
    %v474 = vunpack.c.l.b16 %v218
    %v475 = vunpack.c.l.b16 %v219
    %v476 = vunpack.c.l.b16 %v220
    %v477 = vunpack.c.l.b16 %v221
    %v478 = vunpack.c.l.b16 %v222
    %v479 = vunpack.c.l.b16 %v223
    %v480 = vunpack.c.l.b16 %v224
    %v481 = vunpack.c.l.b16 %v225
    %v482 = vunpack.c.l.b16 %v226
    %v483 = vunpack.c.l.b16 %v227
    %v484 = vunpack.c.l.b16 %v228
    %v485 = vunpack.c.l.b16 %v229
    %v486 = vunpack.c.l.b16 %v230
    %v487 = vunpack.c.l.b16 %v231
    %v488 = vunpack.c.l.b16 %v232
    %v489 = vunpack.c.l.b16 %v233
    %v490 = vunpack.c.l.b16 %v234
    %v491 = vunpack.c.l.b16 %v235
    %v492 = vunpack.c.l.b16 %v236
    %v493 = vunpack.c.l.b16 %v237
    %v494 = vunpack.c.l.b16 %v238
    %v495 = vunpack.c.l.b16 %v239
    %v496 = vunpack.c.l.b16 %v240
    %v497 = vunpack.c.l.b16 %v241
    %v498 = vunpack.c.l.b16 %v242
    %v499 = vunpack.c.l.b16 %v243
    %v500 = vunpack.c.l.b16 %v244
    %v501 = vunpack.c.l.b16 %v245
    %v502 = vunpack.c.l.b16 %v246
    %v503 = vunpack.c.l.b16 %v247
    %v504 = vunpack.c.l.b16 %v248
    %v505 = vunpack.c.l.b16 %v249
    %v506 = vunpack.c.l.b16 %v250
    %v507 = vunpack.c.l.b16 %v251
    %v508 = vunpack.c.l.b16 %v252
    %v509 = vunpack.c.l.b16 %v253
    %v510 = vunpack.c.l.b16 %v254
    %v511 = vunpack.c.l.b16 %v255
    %v512 = vunpack.c.l.b16 %v256
    %v513 = vunpack.c.l.b16 %v257
    %v514 = vunpack.c.l.b16 %v258
    %v515 = vunpack.c.l.b16 %v259
    %v516 = vunpack.c.l.b16 %v260
    %v517 = vunpack.c.l.b16 %v261
    %v518 = vunpack.c.l.b16 %v262
    %v519 = vunpack.c.l.b16 %v263
    %v520 = vpack.c.b16 %v393, %v392
    %v521 = vpack.c.b16 %v395, %v394
    %v522 = vpack.c.b16 %v397, %v396
    %v523 = vpack.c.b16 %v399, %v398
    %v524 = vpack.c.b16 %v401, %v400
    %v525 = vpack.c.b16 %v403, %v402
    %v526 = vpack.c.b16 %v405, %v404
    %v527 = vpack.c.b16 %v407, %v406
    %v528 = vpack.c.b16 %v409, %v408
    %v529 = vpack.c.b16 %v411, %v410
    %v530 = vpack.c.b16 %v413, %v412
    %v531 = vpack.c.b16 %v415, %v414
    %v532 = vpack.c.b16 %v417, %v416
    %v533 = vpack.c.b16 %v419, %v418
    %v534 = vpack.c.b16 %v421, %v420
    %v535 = vpack.c.b16 %v423, %v422
    %v536 = vpack.c.b16 %v425, %v424
    %v537 = vpack.c.b16 %v427, %v426
    %v538 = vpack.c.b16 %v429, %v428
    %v539 = vpack.c.b16 %v431, %v430
    %v540 = vpack.c.b16 %v433, %v432
    %v541 = vpack.c.b16 %v435, %v434
    %v542 = vpack.c.b16 %v437, %v436
    %v543 = vpack.c.b16 %v439, %v438
    %v544 = vpack.c.b16 %v441, %v440
    %v545 = vpack.c.b16 %v443, %v442
    %v546 = vpack.c.b16 %v445, %v444
    %v547 = vpack.c.b16 %v447, %v446
    %v548 = vpack.c.b16 %v449, %v448
    %v549 = vpack.c.b16 %v451, %v450
    %v550 = vpack.c.b16 %v453, %v452
    %v551 = vpack.c.b16 %v455, %v454
    %v552 = vpack.c.b16 %v457, %v456
    %v553 = vpack.c.b16 %v459, %v458
    %v554 = vpack.c.b16 %v461, %v460
    %v555 = vpack.c.b16 %v463, %v462
    %v556 = vpack.c.b16 %v465, %v464
    %v557 = vpack.c.b16 %v467, %v466
    %v558 = vpack.c.b16 %v469, %v468
    %v559 = vpack.c.b16 %v471, %v470
    %v560 = vpack.c.b16 %v473, %v472
    %v561 = vpack.c.b16 %v475, %v474
    %v562 = vpack.c.b16 %v477, %v476
    %v563 = vpack.c.b16 %v479, %v478
    %v564 = vpack.c.b16 %v481, %v480
    %v565 = vpack.c.b16 %v483, %v482
    %v566 = vpack.c.b16 %v485, %v484
    %v567 = vpack.c.b16 %v487, %v486
    %v568 = vpack.c.b16 %v489, %v488
    %v569 = vpack.c.b16 %v491, %v490
    %v570 = vpack.c.b16 %v493, %v492
    %v571 = vpack.c.b16 %v495, %v494
    %v572 = vpack.c.b16 %v497, %v496
    %v573 = vpack.c.b16 %v499, %v498
    %v574 = vpack.c.b16 %v501, %v500
    %v575 = vpack.c.b16 %v503, %v502
    %v576 = vpack.c.b16 %v505, %v504
    %v577 = vpack.c.b16 %v507, %v506
    %v578 = vpack.c.b16 %v509, %v508
    %v579 = vpack.c.b16 %v511, %v510
    %v580 = vpack.c.b16 %v513, %v512
    %v581 = vpack.c.b16 %v515, %v514
    %v582 = vpack.c.b16 %v517, %v516
    %v583 = vpack.c.b16 %v519, %v518
    %648 = vmatpush.bf16.msra.mxu0 %v527
    %649 = vmatpush.bf16.msra.mxu0 %v526
    %650 = vmatpush.bf16.msra.mxu0 %v525
    %651 = vmatpush.bf16.msra.mxu0 %v524
    %652 = vmatpush.bf16.msra.mxu0 %v523
    %653 = vmatpush.bf16.msra.mxu0 %v522
    %654 = vmatpush.bf16.msra.mxu0 %v521
    %655 = vmatpush.bf16.msra.mxu0 %v520
    %656 = vmatmul.bf16.gmra.mxu0 %v128
    %v657 = vpop.f32.mrf.mxu0
    %v658 = vadd.f32 0.0, %v657
    %v659 = vpop.f32.mrf.mxu0
    %660 = vdwg.mxu0
    %661 = vmatpush.bf16.msra.mxu0 %v535
    %662 = vmatpush.bf16.msra.mxu0 %v534
    %663 = vmatpush.bf16.msra.mxu0 %v533
    %664 = vmatpush.bf16.msra.mxu0 %v532
    %665 = vmatpush.bf16.msra.mxu0 %v531
    %666 = vmatpush.bf16.msra.mxu0 %v530
    %667 = vmatpush.bf16.msra.mxu0 %v529
    %668 = vmatpush.bf16.msra.mxu0 %v528
    %669 = vmatmul.bf16.gmra.mxu0 %v129
    %v670 = vpop.f32.mrf.mxu0
    %v671 = vadd.f32 %v658, %v670
    %v672 = vpop.f32.mrf.mxu0
    %673 = vdwg.mxu0
    %674 = vmatpush.bf16.msra.mxu0 %v543
    %675 = vmatpush.bf16.msra.mxu0 %v542
    %676 = vmatpush.bf16.msra.mxu0 %v541
    %677 = vmatpush.bf16.msra.mxu0 %v540
    %678 = vmatpush.bf16.msra.mxu0 %v539
    %679 = vmatpush.bf16.msra.mxu0 %v538
    %680 = vmatpush.bf16.msra.mxu0 %v537
    %681 = vmatpush.bf16.msra.mxu0 %v536
    %682 = vmatmul.bf16.gmra.mxu0 %v130
    %v683 = vpop.f32.mrf.mxu0
    %v684 = vadd.f32 %v671, %v683
    %v685 = vpop.f32.mrf.mxu0
    %686 = vdwg.mxu0
    %687 = vmatpush.bf16.msra.mxu0 %v551
    %688 = vmatpush.bf16.msra.mxu0 %v550
    %689 = vmatpush.bf16.msra.mxu0 %v549
    %690 = vmatpush.bf16.msra.mxu0 %v548
    %691 = vmatpush.bf16.msra.mxu0 %v547
    %692 = vmatpush.bf16.msra.mxu0 %v546
    %693 = vmatpush.bf16.msra.mxu0 %v545
    %694 = vmatpush.bf16.msra.mxu0 %v544
    %695 = vmatmul.bf16.gmra.mxu0 %v131
    %v696 = vpop.f32.mrf.mxu0
    %v697 = vadd.f32 %v684, %v696
    %v698 = vpop.f32.mrf.mxu0
    %699 = vdwg.mxu0
    %700 = vmatpush.bf16.msra.mxu0 %v559
    %701 = vmatpush.bf16.msra.mxu0 %v558
    %702 = vmatpush.bf16.msra.mxu0 %v557
    %703 = vmatpush.bf16.msra.mxu0 %v556
    %704 = vmatpush.bf16.msra.mxu0 %v555
    %705 = vmatpush.bf16.msra.mxu0 %v554
    %706 = vmatpush.bf16.msra.mxu0 %v553
    %707 = vmatpush.bf16.msra.mxu0 %v552
    %708 = vmatmul.bf16.gmra.mxu0 %v132
    %v709 = vpop.f32.mrf.mxu0
    %v710 = vadd.f32 %v697, %v709
    %v711 = vpop.f32.mrf.mxu0
    %712 = vdwg.mxu0
    %713 = vmatpush.bf16.msra.mxu0 %v567
    %714 = vmatpush.bf16.msra.mxu0 %v566
    %715 = vmatpush.bf16.msra.mxu0 %v565
    %716 = vmatpush.bf16.msra.mxu0 %v564
    %717 = vmatpush.bf16.msra.mxu0 %v563
    %718 = vmatpush.bf16.msra.mxu0 %v562
    %719 = vmatpush.bf16.msra.mxu0 %v561
    %720 = vmatpush.bf16.msra.mxu0 %v560
    %721 = vmatmul.bf16.gmra.mxu0 %v133
    %v722 = vpop.f32.mrf.mxu0
    %v723 = vadd.f32 %v710, %v722
    %v724 = vpop.f32.mrf.mxu0
    %725 = vdwg.mxu0
    %726 = vmatpush.bf16.msra.mxu0 %v575
    %727 = vmatpush.bf16.msra.mxu0 %v574
    %728 = vmatpush.bf16.msra.mxu0 %v573
    %729 = vmatpush.bf16.msra.mxu0 %v572
    %730 = vmatpush.bf16.msra.mxu0 %v571
    %731 = vmatpush.bf16.msra.mxu0 %v570
    %732 = vmatpush.bf16.msra.mxu0 %v569
    %733 = vmatpush.bf16.msra.mxu0 %v568
    %734 = vmatmul.bf16.gmra.mxu0 %v134
    %v735 = vpop.f32.mrf.mxu0
    %v736 = vadd.f32 %v723, %v735
    %v737 = vpop.f32.mrf.mxu0
    %738 = vdwg.mxu0
    %739 = vmatpush.bf16.msra.mxu0 %v583
    %740 = vmatpush.bf16.msra.mxu0 %v582
    %741 = vmatpush.bf16.msra.mxu0 %v581
    %742 = vmatpush.bf16.msra.mxu0 %v580
    %743 = vmatpush.bf16.msra.mxu0 %v579
    %744 = vmatpush.bf16.msra.mxu0 %v578
    %745 = vmatpush.bf16.msra.mxu0 %v577
    %746 = vmatpush.bf16.msra.mxu0 %v576
    %747 = vmatmul.bf16.gmra.mxu0 %v135
    %v748 = vpop.f32.mrf.mxu0
    %v749 = vadd.f32 %v736, %v748
    %v750 = vpop.f32.mrf.mxu0
    %751 = vdwg.mxu0
    %v752 = vmul.f32 %v749, %v119
    %v753 = vrot.slane %v752, 4
    %v754 = vadd.f32 %v752, %v753
    %v755 = vrot.slane %v754, 2
    %v756 = vadd.f32 %v754, %v755
    %v757 = vrot.slane %v756, 1
    %v758 = vadd.f32 %v756, %v757
    %v759 = vmul.f32 %v758, 0.5
    %v760 = vsub.f32 %v749, %v759
    %v761 = vmul.f32 %v760, %v119
    %v762 = vmul.f32 %v761, %v761
    %v763 = vrot.slane %v762, 4
    %v764 = vadd.f32 %v762, %v763
    %v765 = vrot.slane %v764, 2
    %v766 = vadd.f32 %v764, %v765
    %v767 = vrot.slane %v766, 1
    %v768 = vadd.f32 %v766, %v767
    %v769 = vmul.f32 %v768, 0.5
    %v770 = vmax.f32 %v769, 0.0
    %v771 = vld [vmem:[%s2] sm:$0x1]
    %v772 = vadd.f32 %v770, 1e-05
    %v773 = vrsqrt.pop %v772
    %v774 = vmul.f32 %v773, %v772
    %v775 = vmul.f32 %v774, %v773
    %v776 = vmul.f32 0.5, %v775
    %v777 = vsub.f32 1.5, %v776
    %v778 = vmul.f32 %v773, %v777
    %vm779 = vweird.f32 %v772
    %vm780 = vweird.f32 %v773
    %vm781 = vmor %vm779, %vm780
    %v782 = vsel %vm781, %v773, %v778
    %v783 = vmul.f32 %v771, %v782
    %v784 = vld [vmem:[%s3] sm:$0x1]
    %v785 = vmul.f32 %v759, %v783
    %v786 = vsub.f32 %v784, %v785
    %v788 = vperm.slane %v783, 0
    %v790 = vmul.f32 %v749, %v788
    %v792 = vperm.slane %v786, 0
    %v794 = vadd.f32 %v790, %v792
    %v795 = vmax.f32 %v794, 0.0
    %v796 = vpack.c.bf16 %v795, %v795
    %v797 = vld [vmem:[#allocation7] sm:$0xf]
    %v798 = vld [vmem:[#allocation7 + $0x4] sm:$0xf]
    %v799 = vld [vmem:[#allocation7 + $0x8] sm:$0xf]
    %v800 = vld [vmem:[#allocation7 + $0xc] sm:$0xf]
    %v801 = vld [vmem:[#allocation7 + $0x10] sm:$0xf]
    %v802 = vld [vmem:[#allocation7 + $0x14] sm:$0xf]
    %v803 = vld [vmem:[#allocation7 + $0x18] sm:$0xf]
    %v804 = vld [vmem:[#allocation7 + $0x1c] sm:$0xf]
    %v805 = vld [vmem:[#allocation7 + $0x20] sm:$0xf]
    %v806 = vld [vmem:[#allocation7 + $0x24] sm:$0xf]
    %v807 = vld [vmem:[#allocation7 + $0x28] sm:$0xf]
    %v808 = vld [vmem:[#allocation7 + $0x2c] sm:$0xf]
    %v809 = vld [vmem:[#allocation7 + $0x30] sm:$0xf]
    %v810 = vld [vmem:[#allocation7 + $0x34] sm:$0xf]
    %v811 = vld [vmem:[#allocation7 + $0x38] sm:$0xf]
    %v812 = vld [vmem:[#allocation7 + $0x3c] sm:$0xf]
    %v813 = vld [vmem:[%s5] sm:$0x1]
    %v815 = vperm.slane %v813, 0
    %v833 = vunpack.c.l.b16 %v797
    %v834 = vunpack.c.l.b16 %v798
    %v835 = vunpack.c.l.b16 %v799
    %v836 = vunpack.c.l.b16 %v800
    %v837 = vunpack.c.l.b16 %v801
    %v838 = vunpack.c.l.b16 %v802
    %v839 = vunpack.c.l.b16 %v803
    %v840 = vunpack.c.l.b16 %v804
    %v841 = vunpack.c.l.b16 %v805
    %v842 = vunpack.c.l.b16 %v806
    %v843 = vunpack.c.l.b16 %v807
    %v844 = vunpack.c.l.b16 %v808
    %v845 = vunpack.c.l.b16 %v809
    %v846 = vunpack.c.l.b16 %v810
    %v847 = vunpack.c.l.b16 %v811
    %v848 = vunpack.c.l.b16 %v812
    %v849 = vpack.c.b16 %v834, %v833
    %v850 = vpack.c.b16 %v836, %v835
    %v851 = vpack.c.b16 %v838, %v837
    %v852 = vpack.c.b16 %v840, %v839
    %v853 = vpack.c.b16 %v842, %v841
    %v854 = vpack.c.b16 %v844, %v843
    %v855 = vpack.c.b16 %v846, %v845
    %v856 = vpack.c.b16 %v848, %v847
    %865 = vmatpush.bf16.msra.mxu0 %v856
    %866 = vmatpush.bf16.msra.mxu0 %v855
    %867 = vmatpush.bf16.msra.mxu0 %v854
    %868 = vmatpush.bf16.msra.mxu0 %v853
    %869 = vmatpush.bf16.msra.mxu0 %v852
    %870 = vmatpush.bf16.msra.mxu0 %v851
    %871 = vmatpush.bf16.msra.mxu0 %v850
    %872 = vmatpush.bf16.msra.mxu0 %v849
    %873 = vmatmul.bf16.gmra.mxu0 %v796
    %v874 = vpop.f32.mrf.mxu0
    %v875 = vadd.f32 %v815, %v874
    %v876 = vpop.f32.mrf.mxu0
    %877 = vdwg.mxu0
    %v878 = vpack.c.bf16 %v875, %v875
    %v879 = vld [vmem:[#allocation8] sm:$0xf]
    %v880 = vld [vmem:[#allocation8 + $0x4] sm:$0xf]
    %v881 = vld [vmem:[#allocation8 + $0x8] sm:$0xf]
    %v882 = vld [vmem:[#allocation8 + $0xc] sm:$0xf]
    %v883 = vld [vmem:[#allocation8 + $0x10] sm:$0xf]
    %v884 = vld [vmem:[#allocation8 + $0x14] sm:$0xf]
    %v885 = vld [vmem:[#allocation8 + $0x18] sm:$0xf]
    %v886 = vld [vmem:[#allocation8 + $0x1c] sm:$0xf]
    %v887 = vld [vmem:[#allocation8 + $0x20] sm:$0xf]
    %v888 = vld [vmem:[#allocation8 + $0x24] sm:$0xf]
    %v889 = vld [vmem:[#allocation8 + $0x28] sm:$0xf]
    %v890 = vld [vmem:[#allocation8 + $0x2c] sm:$0xf]
    %v891 = vld [vmem:[#allocation8 + $0x30] sm:$0xf]
    %v892 = vld [vmem:[#allocation8 + $0x34] sm:$0xf]
    %v893 = vld [vmem:[#allocation8 + $0x38] sm:$0xf]
    %v894 = vld [vmem:[#allocation8 + $0x3c] sm:$0xf]
    %v911 = vunpack.c.l.b16 %v879
    %v912 = vunpack.c.l.b16 %v880
    %v913 = vunpack.c.l.b16 %v881
    %v914 = vunpack.c.l.b16 %v882
    %v915 = vunpack.c.l.b16 %v883
    %v916 = vunpack.c.l.b16 %v884
    %v917 = vunpack.c.l.b16 %v885
    %v918 = vunpack.c.l.b16 %v886
    %v919 = vunpack.c.l.b16 %v887
    %v920 = vunpack.c.l.b16 %v888
    %v921 = vunpack.c.l.b16 %v889
    %v922 = vunpack.c.l.b16 %v890
    %v923 = vunpack.c.l.b16 %v891
    %v924 = vunpack.c.l.b16 %v892
    %v925 = vunpack.c.l.b16 %v893
    %v926 = vunpack.c.l.b16 %v894
    %v927 = vpack.c.b16 %v912, %v911
    %v928 = vpack.c.b16 %v914, %v913
    %v929 = vpack.c.b16 %v916, %v915
    %v930 = vpack.c.b16 %v918, %v917
    %v931 = vpack.c.b16 %v920, %v919
    %v932 = vpack.c.b16 %v922, %v921
    %v933 = vpack.c.b16 %v924, %v923
    %v934 = vpack.c.b16 %v926, %v925
    %943 = vmatpush.bf16.msra.mxu0 %v934
    %944 = vmatpush.bf16.msra.mxu0 %v933
    %945 = vmatpush.bf16.msra.mxu0 %v932
    %946 = vmatpush.bf16.msra.mxu0 %v931
    %947 = vmatpush.bf16.msra.mxu0 %v930
    %948 = vmatpush.bf16.msra.mxu0 %v929
    %949 = vmatpush.bf16.msra.mxu0 %v928
    %950 = vmatpush.bf16.msra.mxu0 %v927
    %951 = vmatmul.bf16.gmra.mxu0 %v878
    %v952 = vpop.f32.mrf.mxu0
    %v953 = vadd.f32 0.0, %v952
    %v954 = vpop.f32.mrf.mxu0
    %955 = vdwg.mxu0
    %v956 = vmul.f32 %v953, %v119
    %v957 = vrot.slane %v956, 4
    %v958 = vadd.f32 %v956, %v957
    %v959 = vrot.slane %v958, 2
    %v960 = vadd.f32 %v958, %v959
    %v961 = vrot.slane %v960, 1
    %v962 = vadd.f32 %v960, %v961
    %v963 = vmul.f32 %v962, 0.5
    %v964 = vsub.f32 %v953, %v963
    %v965 = vmul.f32 %v964, %v119
    %v966 = vmul.f32 %v965, %v965
    %v967 = vrot.slane %v966, 4
    %v968 = vadd.f32 %v966, %v967
    %v969 = vrot.slane %v968, 2
    %v970 = vadd.f32 %v968, %v969
    %v971 = vrot.slane %v970, 1
    %v972 = vadd.f32 %v970, %v971
    %v973 = vmul.f32 %v972, 0.5
    %v974 = vmax.f32 %v973, 0.0
    %v975 = vld [vmem:[%s7] sm:$0x1]
    %v976 = vadd.f32 %v974, 1e-05
    %v977 = vrsqrt.pop %v976
    %v978 = vmul.f32 %v977, %v976
    %v979 = vmul.f32 %v978, %v977
    %v980 = vmul.f32 0.5, %v979
    %v981 = vsub.f32 1.5, %v980
    %v982 = vmul.f32 %v977, %v981
    %vm983 = vweird.f32 %v976
    %vm984 = vweird.f32 %v977
    %vm985 = vmor %vm983, %vm984
    %v986 = vsel %vm985, %v977, %v982
    %v987 = vmul.f32 %v975, %v986
    %v988 = vld [vmem:[%s8] sm:$0x1]
    %v989 = vmul.f32 %v963, %v987
    %v990 = vsub.f32 %v988, %v989
    %v992 = vperm.slane %v987, 0
    %v994 = vmul.f32 %v953, %v992
    %v996 = vperm.slane %v990, 0
    %v998 = vadd.f32 %v994, %v996
    %v999 = vmax.f32 %v998, 0.0
    %v1000 = vpack.c.bf16 %v999, %v999
    %v1001 = vld [vmem:[#allocation10] sm:$0xf]
    %v1002 = vld [vmem:[#allocation10 + $0x4] sm:$0xf]
    %v1003 = vld [vmem:[#allocation10 + $0x8] sm:$0xf]
    %v1004 = vld [vmem:[#allocation10 + $0xc] sm:$0xf]
    %v1005 = vld [vmem:[#allocation10 + $0x10] sm:$0xf]
    %v1006 = vld [vmem:[#allocation10 + $0x14] sm:$0xf]
    %v1007 = vld [vmem:[#allocation10 + $0x18] sm:$0xf]
    %v1008 = vld [vmem:[#allocation10 + $0x1c] sm:$0xf]
    %v1009 = vld [vmem:[#allocation10 + $0x20] sm:$0xf]
    %v1010 = vld [vmem:[#allocation10 + $0x24] sm:$0xf]
    %v1011 = vld [vmem:[#allocation10 + $0x28] sm:$0xf]
    %v1012 = vld [vmem:[#allocation10 + $0x2c] sm:$0xf]
    %v1013 = vld [vmem:[#allocation10 + $0x30] sm:$0xf]
    %v1014 = vld [vmem:[#allocation10 + $0x34] sm:$0xf]
    %v1015 = vld [vmem:[#allocation10 + $0x38] sm:$0xf]
    %v1016 = vld [vmem:[#allocation10 + $0x3c] sm:$0xf]
    %v1017 = vld [vmem:[%s10] sm:$0x1]
    %v1019 = vperm.slane %v1017, 0
    %v1037 = vunpack.c.l.b16 %v1001
    %v1038 = vunpack.c.l.b16 %v1002
    %v1039 = vunpack.c.l.b16 %v1003
    %v1040 = vunpack.c.l.b16 %v1004
    %v1041 = vunpack.c.l.b16 %v1005
    %v1042 = vunpack.c.l.b16 %v1006
    %v1043 = vunpack.c.l.b16 %v1007
    %v1044 = vunpack.c.l.b16 %v1008
    %v1045 = vunpack.c.l.b16 %v1009
    %v1046 = vunpack.c.l.b16 %v1010
    %v1047 = vunpack.c.l.b16 %v1011
    %v1048 = vunpack.c.l.b16 %v1012
    %v1049 = vunpack.c.l.b16 %v1013
    %v1050 = vunpack.c.l.b16 %v1014
    %v1051 = vunpack.c.l.b16 %v1015
    %v1052 = vunpack.c.l.b16 %v1016
    %v1053 = vpack.c.b16 %v1038, %v1037
    %v1054 = vpack.c.b16 %v1040, %v1039
    %v1055 = vpack.c.b16 %v1042, %v1041
    %v1056 = vpack.c.b16 %v1044, %v1043
    %v1057 = vpack.c.b16 %v1046, %v1045
    %v1058 = vpack.c.b16 %v1048, %v1047
    %v1059 = vpack.c.b16 %v1050, %v1049
    %v1060 = vpack.c.b16 %v1052, %v1051
    %1069 = vmatpush.bf16.msra.mxu0 %v1060
    %1070 = vmatpush.bf16.msra.mxu0 %v1059
    %1071 = vmatpush.bf16.msra.mxu0 %v1058
    %1072 = vmatpush.bf16.msra.mxu0 %v1057
    %1073 = vmatpush.bf16.msra.mxu0 %v1056
    %1074 = vmatpush.bf16.msra.mxu0 %v1055
    %1075 = vmatpush.bf16.msra.mxu0 %v1054
    %1076 = vmatpush.bf16.msra.mxu0 %v1053
    %1077 = vmatmul.bf16.gmra.mxu0 %v1000
    %v1078 = vpop.f32.mrf.mxu0
    %v1079 = vadd.f32 %v1019, %v1078
    %v1080 = vpop.f32.mrf.mxu0
    %1081 = vdwg.mxu0
    %1082 = vst [vmem:[#allocation11] sm:$0xff] %v875
    %1083 = vst [vmem:[#allocation11 + $0x8] sm:$0xff] %v1079
    // Predicated region
    $region66: #{tpu_custom_call.1} parent=1 // pred_check
      _
    $region67: #{tpu_custom_call.1} parent=1 // pred_check_branch
      %1085 = sbr.rel (0) target = $region69
    $region68: #{tpu_custom_call.1} parent=1 // pred_region
      %1087 = vsyncadd [#allocation4], 0
      %s1089 = sshll.u32 [#allocation11], 4
      %s1090 = int_to_ptr.vmem [resolvable:$true] %s1089
      %s1091 = sshll.u32 %s11, 4
      %s1092 = int_to_ptr.hbm [resolvable:$true] %s1091
      %1094 = dma.vmem_to_hbm [thread:$0]  %s1090, 256, %s1092, [#allocation4]
    $region69: #{tpu_custom_call.1} parent=1 // pred_fallthru
      _
    // Predicated region
    $region70: #{tpu_custom_call.1} parent=1 // pred_check
      _
    $region71: #{tpu_custom_call.1} parent=1 // pred_check_branch
      %1096 = sbr.rel (0) target = $region73
    $region72: #{tpu_custom_call.1} parent=1 // pred_region
      %1098 = dma.done [#allocation4], 256
    $region73: #{tpu_custom_call.1} parent=1 // pred_fallthru
      _
    %1099 = vsyncpa [#allocation3], 1
    %1100 = vsyncpa [#allocation6], 1
    %1101 = vsyncpa [#allocation9], 1
    %1102 = vsyncpa [#allocation4], 1

</llo_original>
